<compile_context>
chip_gen: v5e
topology: v5e:2x2
jax: 0.10.0
libtpu: 0.0.40
codegen_flags: <defaults>
</compile_context>

<pallas_src>
import jax
import jax.numpy as jnp
from jax.experimental import pallas as pl
from jax.experimental.pallas import tpu as pltpu


LANE = 128  # vreg lane width / MXU tile width


def _round_up(x, m):
    return ((x + m - 1) // m) * m


# ----------------------------------------------------------------------------- kernel
def _make_mlp_kernel(n_layers, compute_dtype=None):
    """Fused MLP kernel for `n_layers` linear layers.

    Ref layout (positional): x_ref, w0, b0, w1, b1, ..., w{L-1}, b{L-1}, o_ref
      x_ref:  [bm, F_in]
      w_i:    [P_in_i, P_out_i]  (pre-transposed, BN-folded, lane-padded, maybe bf16)
      b_i:    [1, P_out_i]       (BN-folded, lane-padded, f32)
      o_ref:  [bm, P_out_last]
    Sigmoid after every layer except the last (matches the PyTorch module).
    """

    def kernel(x_ref, *refs):
        o_ref = refs[-1]
        h = x_ref[...]
        for i in range(n_layers):
            w = refs[2 * i][...]          # already in compute dtype (pre-cast at fold time)
            b = refs[2 * i + 1][...]      # f32 bias, added after f32 accumulation
            if compute_dtype is not None:
                h = h.astype(compute_dtype)   # only the activation is cast in-kernel
            h = jnp.dot(h, w, preferred_element_type=jnp.float32) + b
            if i < n_layers - 1:
                h = jax.nn.sigmoid(h)         # EUP transcendental (free VLIW slot)
        o_ref[...] = h.astype(o_ref.dtype)

    return kernel


def _pick_block_m(n, block_m):
    """Batch tile: as tall as allowed, but with >=2 grid steps for v7x megacore when possible."""
    bm = min(block_m, n)
    if n >= 2 * LANE and pl.cdiv(n, bm) < 2:
        bm = min(n, _round_up(pl.cdiv(n, 2), LANE))   # split the batch across 2 TCs
    if bm != n and bm % 8 != 0:
        bm = _round_up(bm, 8)                          # sublane alignment for partial tiles
    return bm


def mlp_forward(folded, x, *, block_m=512):
    """Run the fully-fused MLP. `folded` comes from fold_params()."""
    layers = folded["layers"]
    n_out = folded["n_out"]
    n, f_in = x.shape
    n_layers = len(layers)
    p_last = layers[-1][0].shape[1]                    # lane-padded output width

    compute_dtype = layers[0][0].dtype
    compute_dtype = None if compute_dtype == jnp.float32 else compute_dtype

    bm = _pick_block_m(n, block_m)
    grid = (pl.cdiv(n, bm),)

    # --- cost estimate (advisory, helps XLA schedule around the fused call) ---
    flops = 0
    transcendentals = 0
    weight_bytes = 0
    for li, (w, b) in enumerate(layers):
        flops += 2 * n * w.shape[0] * w.shape[1]
        if li < n_layers - 1:
            transcendentals += n * w.shape[1]          # sigmoid
        weight_bytes += w.size * w.dtype.itemsize + b.size * b.dtype.itemsize
    bytes_accessed = (x.size * x.dtype.itemsize + weight_bytes + n * p_last * 4)
    cost = pl.CostEstimate(flops=flops, transcendentals=transcendentals,
                           bytes_accessed=bytes_accessed)

    # --- VMEM budget: resident weights (+buffering) + double-buffered x/out tiles ---
    act_bytes = 2 * bm * (f_in + p_last) * 4
    vmem_bytes = int(2 * weight_bytes + act_bytes + (8 << 20))   # headroom
    vmem_bytes = min(vmem_bytes, 64 << 20)                       # never exceed v7x physical

    compiler_params = pltpu.CompilerParams(
        dimension_semantics=("parallel",),             # shard batch tiles over v7x's 2 TCs
        vmem_limit_bytes=vmem_bytes,
    )

    kernel = _make_mlp_kernel(n_layers, compute_dtype=compute_dtype)
    out_shape = jax.ShapeDtypeStruct((n, p_last), jnp.float32)
    out_specs = pl.BlockSpec((bm, p_last), lambda i: (i, 0))

    flat_args = []
    for w, b in layers:
        flat_args.extend([w, b])

    def build(single_buffer_weights):
        in_specs = [pl.BlockSpec((bm, f_in), lambda i: (i, 0))]
        for w, b in layers:
            if single_buffer_weights:
                # Constant index map => the block never changes; one buffer suffices
                # (halves weight VMEM residency — matters on v7x's 64 MiB).
                in_specs.append(pl.BlockSpec(w.shape, lambda i: (0, 0),
                                             pipeline_mode=pl.Buffered(1)))
                in_specs.append(pl.BlockSpec(b.shape, lambda i: (0, 0),
                                             pipeline_mode=pl.Buffered(1)))
            else:
                in_specs.append(pl.BlockSpec(w.shape, lambda i: (0, 0)))
                in_specs.append(pl.BlockSpec(b.shape, lambda i: (0, 0)))
        return pl.pallas_call(
            kernel,
            out_shape=out_shape,
            grid=grid,
            in_specs=in_specs,
            out_specs=out_specs,
            compiler_params=compiler_params,
            cost_estimate=cost,
        )

    try:
        y_pad = build(single_buffer_weights=True)(x, *flat_args)
    except Exception:
        # Older jax without pipeline_mode=Buffered(1) support: fall back to default buffering.
        y_pad = build(single_buffer_weights=False)(x, *flat_args)

    y_pad = jax.block_until_ready(y_pad)
    return y_pad[:, :n_out]                            # drop lane-padding outside the kernel


# ----------------------------------------------------------------------------- param prep
def init_mlp_params(key, n_feature, n_hidden, n_output):
    """Deterministic parameter init matching the PyTorch module's shapes."""
    layer_sizes = list(n_hidden) + [n_output]
    params = {"layers": [], "bns": []}
    current = n_feature
    for i in range(len(layer_sizes) - 1):
        out_f = layer_sizes[i]
        key, kw, kb, kg, kbt, km, kv = jax.random.split(key, 7)
        bound = 1.0 / jnp.sqrt(current)
        params["layers"].append({
            "w": jax.random.uniform(kw, (out_f, current), jnp.float32, -bound, bound),
            "b": jax.random.uniform(kb, (out_f,), jnp.float32, -bound, bound),
        })
        params["bns"].append({
            "gamma": 1.0 + 0.1 * jax.random.normal(kg, (out_f,), jnp.float32),
            "beta": 0.1 * jax.random.normal(kbt, (out_f,), jnp.float32),
            "running_mean": 0.1 * jax.random.normal(km, (out_f,), jnp.float32),
            "running_var": 1.0 + 0.1 * jax.random.uniform(kv, (out_f,), jnp.float32),
        })
        current = out_f
    key, kw, kb = jax.random.split(key, 3)
    bound = 1.0 / jnp.sqrt(current)
    params["out_layer"] = {
        "w": jax.random.uniform(kw, (n_output, current), jnp.float32, -bound, bound),
        "b": jax.random.uniform(kb, (n_output,), jnp.float32, -bound, bound),
    }
    return params


def fold_params(params, eps=1e-5, compute_dtype=None):
    """One-time prep: transpose to [F_in, F_out], fold BN into W/b, zero-pad every output
    width to a multiple of 128 (lane-dense), and optionally pre-cast weights to bf16.

    y = BN(x @ W.T + b) = x @ (W.T * scale) + (b * scale + shift)
      scale = gamma / sqrt(rv + eps),  shift = beta - rm * scale

    Padding correctness: padded output columns of layer i carry bias 0 (-> sigmoid = 0.5)
    but the matching input ROWS of layer i+1 are zero-padded, so they contribute nothing.
    Padded output columns of the last layer are sliced off in mlp_forward.
    """
    raw = []
    for lin, bn in zip(params["layers"], params["bns"]):
        inv_std = 1.0 / jnp.sqrt(bn["running_var"] + eps)
        scale = bn["gamma"] * inv_std
        shift = bn["beta"] - bn["running_mean"] * scale
        w = lin["w"].T * scale[None, :]                # [F_in, F_out]
        b = lin["b"] * scale + shift                   # [F_out]
        raw.append((w.astype(jnp.float32), b.astype(jnp.float32)))
    out = params["out_layer"]
    raw.append((jnp.asarray(out["w"].T, jnp.float32), out["b"].astype(jnp.float32)))

    n_out = raw[-1][0].shape[1]
    fused = []
    prev_pad = None                                    # padded input rows for this layer
    for w, b in raw:
        f_in, f_out = w.shape
        p_in = f_in if prev_pad is None else prev_pad  # first layer keeps true F_in
        p_out = _round_up(f_out, LANE)
        w = jnp.pad(w, ((0, p_in - f_in), (0, p_out - f_out)))
        b = jnp.pad(b, (0, p_out - f_out)).reshape(1, -1)
        if compute_dtype is not None:
            w = w.astype(compute_dtype)                # store bf16 weights in HBM (v6e/v7x)
        fused.append((w, b.astype(jnp.float32)))
        prev_pad = p_out
    return {"layers": fused, "n_out": n_out}


def mlp_reference(params, x, eps=1e-5):
    """Pure-JAX reference (eval-mode semantics) for verification."""
    for lin, bn in zip(params["layers"], params["bns"]):
        x = x @ lin["w"].T + lin["b"]
        x = (x - bn["running_mean"]) / jnp.sqrt(bn["running_var"] + eps)
        x = x * bn["gamma"] + bn["beta"]
        x = jax.nn.sigmoid(x)
    out = params["out_layer"]
    return x @ out["w"].T + out["b"]


# ----------------------------------------------------------------------------- main
if __name__ == "__main__":
    n_feature, n_hidden, n_output = 32, (64, 32), 8
    batch = 8

    key = jax.random.PRNGKey(0)
    kparams, kx = jax.random.split(key)
    params = init_mlp_params(kparams, n_feature, n_hidden, n_output)
    x = jax.random.normal(kx, (batch, n_feature), jnp.float32)

    # f32 path by default for exact parity with the reference; pass
    # compute_dtype=jnp.bfloat16 for v6e/v7x MXU throughput (loosen tolerances then).
    folded = fold_params(params, compute_dtype=None)   # one-time: transpose + BN fold + pad
    y = mlp_forward(folded, x)                         # single fused, lane-dense Pallas kernel
    y = jax.block_until_ready(y)

    y_ref = mlp_reference(params, x)
    assert y.shape == (batch, n_output)
    assert jnp.allclose(y, y_ref, atol=1e-5, rtol=1e-5), "mismatch vs reference"

    print("KERNEL_OK")
</pallas_src>

<mosaic_0001>
module attributes {stable_mosaic.version = 11 : i64} {
  func.func @kernel(%arg0: i32, %arg1: memref<8x32xf32, #tpu.memory_space<vmem>>, %arg2: memref<32x128xf32, #tpu.memory_space<vmem>>, %arg3: memref<1x128xf32, #tpu.memory_space<vmem>>, %arg4: memref<128x128xf32, #tpu.memory_space<vmem>>, %arg5: memref<1x128xf32, #tpu.memory_space<vmem>>, %arg6: memref<128x128xf32, #tpu.memory_space<vmem>>, %arg7: memref<1x128xf32, #tpu.memory_space<vmem>>, %arg8: memref<8x128xf32, #tpu.memory_space<vmem>>) attributes {dimension_semantics = [#tpu.dimension_semantics<parallel>], iteration_bounds = array<i64: 1>, scalar_prefetch = 0 : i64, scratch_operands = 0 : i64, tpu.core_type = #tpu.core_type<tc>, window_params = [{transform_indices = @transform_0, window_bounds = array<i64: 8, 32>}, {pipeline_mode = #tpu.pipeline_mode<synchronous>, transform_indices = @transform_1, window_bounds = array<i64: 32, 128>}, {pipeline_mode = #tpu.pipeline_mode<synchronous>, transform_indices = @transform_2, window_bounds = array<i64: 1, 128>}, {pipeline_mode = #tpu.pipeline_mode<synchronous>, transform_indices = @transform_3, window_bounds = array<i64: 128, 128>}, {pipeline_mode = #tpu.pipeline_mode<synchronous>, transform_indices = @transform_4, window_bounds = array<i64: 1, 128>}, {pipeline_mode = #tpu.pipeline_mode<synchronous>, transform_indices = @transform_5, window_bounds = array<i64: 128, 128>}, {pipeline_mode = #tpu.pipeline_mode<synchronous>, transform_indices = @transform_6, window_bounds = array<i64: 1, 128>}, {transform_indices = @transform_7, window_bounds = array<i64: 8, 128>}]} {
    %c0 = arith.constant 0 : index
    %c0_0 = arith.constant 0 : index
    %0 = vector.load %arg1[%c0, %c0_0] : memref<8x32xf32, #tpu.memory_space<vmem>>, vector<8x32xf32>
    %c0_1 = arith.constant 0 : index
    %c0_2 = arith.constant 0 : index
    %1 = vector.load %arg2[%c0_1, %c0_2] : memref<32x128xf32, #tpu.memory_space<vmem>>, vector<32x128xf32>
    %c0_3 = arith.constant 0 : index
    %c0_4 = arith.constant 0 : index
    %2 = vector.load %arg3[%c0_3, %c0_4] : memref<1x128xf32, #tpu.memory_space<vmem>>, vector<1x128xf32>
    %cst = arith.constant dense<0.000000e+00> : vector<8x128xf32>
    %3 = tpu.matmul %0, %1, %cst {dimension_numbers = #tpu.dot_dimension_numbers<[1], [0], [0], [1], [0, 0, 1, 1], [], []>} : vector<8x32xf32>, vector<32x128xf32>, vector<8x128xf32> -> vector<8x128xf32>
    %4 = vector.broadcast %2 : vector<1x128xf32> to vector<8x128xf32>
    %5 = arith.addf %3, %4 : vector<8x128xf32>
    %6 = arith.negf %5 : vector<8x128xf32>
    %7 = math.exp %6 : vector<8x128xf32>
    %cst_5 = arith.constant 1.000000e+00 : f32
    %8 = vector.broadcast %cst_5 : f32 to vector<8x128xf32>
    %9 = arith.addf %8, %7 : vector<8x128xf32>
    %10 = arith.divf %8, %9 : vector<8x128xf32>
    %c0_6 = arith.constant 0 : index
    %c0_7 = arith.constant 0 : index
    %11 = vector.load %arg4[%c0_6, %c0_7] : memref<128x128xf32, #tpu.memory_space<vmem>>, vector<128x128xf32>
    %c0_8 = arith.constant 0 : index
    %c0_9 = arith.constant 0 : index
    %12 = vector.load %arg5[%c0_8, %c0_9] : memref<1x128xf32, #tpu.memory_space<vmem>>, vector<1x128xf32>
    %cst_10 = arith.constant dense<0.000000e+00> : vector<8x128xf32>
    %13 = tpu.matmul %10, %11, %cst_10 {dimension_numbers = #tpu.dot_dimension_numbers<[1], [0], [0], [1], [0, 0, 1, 1], [], []>} : vector<8x128xf32>, vector<128x128xf32>, vector<8x128xf32> -> vector<8x128xf32>
    %14 = vector.broadcast %12 : vector<1x128xf32> to vector<8x128xf32>
    %15 = arith.addf %13, %14 : vector<8x128xf32>
    %16 = arith.negf %15 : vector<8x128xf32>
    %17 = math.exp %16 : vector<8x128xf32>
    %cst_11 = arith.constant 1.000000e+00 : f32
    %18 = vector.broadcast %cst_11 : f32 to vector<8x128xf32>
    %19 = arith.addf %18, %17 : vector<8x128xf32>
    %20 = arith.divf %18, %19 : vector<8x128xf32>
    %c0_12 = arith.constant 0 : index
    %c0_13 = arith.constant 0 : index
    %21 = vector.load %arg6[%c0_12, %c0_13] : memref<128x128xf32, #tpu.memory_space<vmem>>, vector<128x128xf32>
    %c0_14 = arith.constant 0 : index
    %c0_15 = arith.constant 0 : index
    %22 = vector.load %arg7[%c0_14, %c0_15] : memref<1x128xf32, #tpu.memory_space<vmem>>, vector<1x128xf32>
    %cst_16 = arith.constant dense<0.000000e+00> : vector<8x128xf32>
    %23 = tpu.matmul %20, %21, %cst_16 {dimension_numbers = #tpu.dot_dimension_numbers<[1], [0], [0], [1], [0, 0, 1, 1], [], []>} : vector<8x128xf32>, vector<128x128xf32>, vector<8x128xf32> -> vector<8x128xf32>
    %24 = vector.broadcast %22 : vector<1x128xf32> to vector<8x128xf32>
    %25 = arith.addf %23, %24 : vector<8x128xf32>
    %c0_17 = arith.constant 0 : index
    %c0_18 = arith.constant 0 : index
    %26 = vector.load %arg8[%c0_17, %c0_18] : memref<8x128xf32, #tpu.memory_space<vmem>>, vector<8x128xf32>
    tpu.vector_store %arg8[%c0_17, %c0_18], %25 {strides = array<i32>} : memref<8x128xf32, #tpu.memory_space<vmem>>, vector<8x128xf32>,
    return
  }
  func.func @transform_0(%arg0: i32) -> (i32, i32) {
    %c0_i32 = arith.constant 0 : i32
    %c0_i32_0 = arith.constant 0 : i32
    return %arg0, %c0_i32 : i32, i32
  }
  func.func @transform_1(%arg0: i32) -> (i32, i32) {
    %c0_i32 = arith.constant 0 : i32
    %c0_i32_0 = arith.constant 0 : i32
    %c0_i32_1 = arith.constant 0 : i32
    return %c0_i32, %c0_i32_0 : i32, i32
  }
  func.func @transform_2(%arg0: i32) -> (i32, i32) {
    %c0_i32 = arith.constant 0 : i32
    %c0_i32_0 = arith.constant 0 : i32
    %c0_i32_1 = arith.constant 0 : i32
    return %c0_i32, %c0_i32_0 : i32, i32
  }
  func.func @transform_3(%arg0: i32) -> (i32, i32) {
    %c0_i32 = arith.constant 0 : i32
    %c0_i32_0 = arith.constant 0 : i32
    %c0_i32_1 = arith.constant 0 : i32
    return %c0_i32, %c0_i32_0 : i32, i32
  }
  func.func @transform_4(%arg0: i32) -> (i32, i32) {
    %c0_i32 = arith.constant 0 : i32
    %c0_i32_0 = arith.constant 0 : i32
    %c0_i32_1 = arith.constant 0 : i32
    return %c0_i32, %c0_i32_0 : i32, i32
  }
  func.func @transform_5(%arg0: i32) -> (i32, i32) {
    %c0_i32 = arith.constant 0 : i32
    %c0_i32_0 = arith.constant 0 : i32
    %c0_i32_1 = arith.constant 0 : i32
    return %c0_i32, %c0_i32_0 : i32, i32
  }
  func.func @transform_6(%arg0: i32) -> (i32, i32) {
    %c0_i32 = arith.constant 0 : i32
    %c0_i32_0 = arith.constant 0 : i32
    %c0_i32_1 = arith.constant 0 : i32
    return %c0_i32, %c0_i32_0 : i32, i32
  }
  func.func @transform_7(%arg0: i32) -> (i32, i32) {
    %c0_i32 = arith.constant 0 : i32
    %c0_i32_0 = arith.constant 0 : i32
    return %arg0, %c0_i32 : i32, i32
  }
}

module attributes {stable_mosaic.version = 11 : i64} {
  func.func @kernel(%arg0: i32, %arg1: memref<8x32xf32, #tpu.memory_space<vmem>>, %arg2: memref<32x128xf32, #tpu.memory_space<vmem>>, %arg3: memref<1x128xf32, #tpu.memory_space<vmem>>, %arg4: memref<128x128xf32, #tpu.memory_space<vmem>>, %arg5: memref<1x128xf32, #tpu.memory_space<vmem>>, %arg6: memref<128x128xf32, #tpu.memory_space<vmem>>, %arg7: memref<1x128xf32, #tpu.memory_space<vmem>>, %arg8: memref<8x128xf32, #tpu.memory_space<vmem>>) attributes {dimension_semantics = [#tpu.dimension_semantics<parallel>], iteration_bounds = array<i64: 1>, scalar_prefetch = 0 : i64, scratch_operands = 0 : i64, tpu.core_type = #tpu.core_type<tc>, window_params = [{transform_indices = @transform_0, window_bounds = array<i64: 8, 32>}, {pipeline_mode = #tpu.pipeline_mode<synchronous>, transform_indices = @transform_1, window_bounds = array<i64: 32, 128>}, {pipeline_mode = #tpu.pipeline_mode<synchronous>, transform_indices = @transform_2, window_bounds = array<i64: 1, 128>}, {pipeline_mode = #tpu.pipeline_mode<synchronous>, transform_indices = @transform_3, window_bounds = array<i64: 128, 128>}, {pipeline_mode = #tpu.pipeline_mode<synchronous>, transform_indices = @transform_4, window_bounds = array<i64: 1, 128>}, {pipeline_mode = #tpu.pipeline_mode<synchronous>, transform_indices = @transform_5, window_bounds = array<i64: 128, 128>}, {pipeline_mode = #tpu.pipeline_mode<synchronous>, transform_indices = @transform_6, window_bounds = array<i64: 1, 128>}, {transform_indices = @transform_7, window_bounds = array<i64: 8, 128>}]} {
    %c0 = arith.constant 0 : index
    %c0_0 = arith.constant 0 : index
    %0 = vector.load %arg1[%c0, %c0_0] : memref<8x32xf32, #tpu.memory_space<vmem>>, vector<8x32xf32>
    %c0_1 = arith.constant 0 : index
    %c0_2 = arith.constant 0 : index
    %1 = vector.load %arg2[%c0_1, %c0_2] : memref<32x128xf32, #tpu.memory_space<vmem>>, vector<32x128xf32>
    %c0_3 = arith.constant 0 : index
    %c0_4 = arith.constant 0 : index
    %2 = vector.load %arg3[%c0_3, %c0_4] : memref<1x128xf32, #tpu.memory_space<vmem>>, vector<1x128xf32>
    %cst = arith.constant dense<0.000000e+00> : vector<8x128xf32>
    %3 = tpu.matmul %0, %1, %cst {dimension_numbers = #tpu.dot_dimension_numbers<[1], [0], [0], [1], [0, 0, 1, 1], [], []>} : vector<8x32xf32>, vector<32x128xf32>, vector<8x128xf32> -> vector<8x128xf32>
    %4 = vector.broadcast %2 : vector<1x128xf32> to vector<8x128xf32>
    %5 = arith.addf %3, %4 : vector<8x128xf32>
    %6 = arith.negf %5 : vector<8x128xf32>
    %7 = math.exp %6 : vector<8x128xf32>
    %cst_5 = arith.constant 1.000000e+00 : f32
    %8 = vector.broadcast %cst_5 : f32 to vector<8x128xf32>
    %9 = arith.addf %8, %7 : vector<8x128xf32>
    %10 = arith.divf %8, %9 : vector<8x128xf32>
    %c0_6 = arith.constant 0 : index
    %c0_7 = arith.constant 0 : index
    %11 = vector.load %arg4[%c0_6, %c0_7] : memref<128x128xf32, #tpu.memory_space<vmem>>, vector<128x128xf32>
    %c0_8 = arith.constant 0 : index
    %c0_9 = arith.constant 0 : index
    %12 = vector.load %arg5[%c0_8, %c0_9] : memref<1x128xf32, #tpu.memory_space<vmem>>, vector<1x128xf32>
    %cst_10 = arith.constant dense<0.000000e+00> : vector<8x128xf32>
    %13 = tpu.matmul %10, %11, %cst_10 {dimension_numbers = #tpu.dot_dimension_numbers<[1], [0], [0], [1], [0, 0, 1, 1], [], []>} : vector<8x128xf32>, vector<128x128xf32>, vector<8x128xf32> -> vector<8x128xf32>
    %14 = vector.broadcast %12 : vector<1x128xf32> to vector<8x128xf32>
    %15 = arith.addf %13, %14 : vector<8x128xf32>
    %16 = arith.negf %15 : vector<8x128xf32>
    %17 = math.exp %16 : vector<8x128xf32>
    %cst_11 = arith.constant 1.000000e+00 : f32
    %18 = vector.broadcast %cst_11 : f32 to vector<8x128xf32>
    %19 = arith.addf %18, %17 : vector<8x128xf32>
    %20 = arith.divf %18, %19 : vector<8x128xf32>
    %c0_12 = arith.constant 0 : index
    %c0_13 = arith.constant 0 : index
    %21 = vector.load %arg6[%c0_12, %c0_13] : memref<128x128xf32, #tpu.memory_space<vmem>>, vector<128x128xf32>
    %c0_14 = arith.constant 0 : index
    %c0_15 = arith.constant 0 : index
    %22 = vector.load %arg7[%c0_14, %c0_15] : memref<1x128xf32, #tpu.memory_space<vmem>>, vector<1x128xf32>
    %cst_16 = arith.constant dense<0.000000e+00> : vector<8x128xf32>
    %23 = tpu.matmul %20, %21, %cst_16 {dimension_numbers = #tpu.dot_dimension_numbers<[1], [0], [0], [1], [0, 0, 1, 1], [], []>} : vector<8x128xf32>, vector<128x128xf32>, vector<8x128xf32> -> vector<8x128xf32>
    %24 = vector.broadcast %22 : vector<1x128xf32> to vector<8x128xf32>
    %25 = arith.addf %23, %24 : vector<8x128xf32>
    %c0_17 = arith.constant 0 : index
    %c0_18 = arith.constant 0 : index
    %26 = vector.load %arg8[%c0_17, %c0_18] : memref<8x128xf32, #tpu.memory_space<vmem>>, vector<8x128xf32>
    tpu.vector_store %arg8[%c0_17, %c0_18], %25 {strides = array<i32>} : memref<8x128xf32, #tpu.memory_space<vmem>>, vector<8x128xf32>,
    return
  }
  func.func @transform_0(%arg0: i32) -> (i32, i32) {
    %c0_i32 = arith.constant 0 : i32
    %c0_i32_0 = arith.constant 0 : i32
    return %arg0, %c0_i32 : i32, i32
  }
  func.func @transform_1(%arg0: i32) -> (i32, i32) {
    %c0_i32 = arith.constant 0 : i32
    %c0_i32_0 = arith.constant 0 : i32
    %c0_i32_1 = arith.constant 0 : i32
    return %c0_i32, %c0_i32_0 : i32, i32
  }
  func.func @transform_2(%arg0: i32) -> (i32, i32) {
    %c0_i32 = arith.constant 0 : i32
    %c0_i32_0 = arith.constant 0 : i32
    %c0_i32_1 = arith.constant 0 : i32
    return %c0_i32, %c0_i32_0 : i32, i32
  }
  func.func @transform_3(%arg0: i32) -> (i32, i32) {
    %c0_i32 = arith.constant 0 : i32
    %c0_i32_0 = arith.constant 0 : i32
    %c0_i32_1 = arith.constant 0 : i32
    return %c0_i32, %c0_i32_0 : i32, i32
  }
  func.func @transform_4(%arg0: i32) -> (i32, i32) {
    %c0_i32 = arith.constant 0 : i32
    %c0_i32_0 = arith.constant 0 : i32
    %c0_i32_1 = arith.constant 0 : i32
    return %c0_i32, %c0_i32_0 : i32, i32
  }
  func.func @transform_5(%arg0: i32) -> (i32, i32) {
    %c0_i32 = arith.constant 0 : i32
    %c0_i32_0 = arith.constant 0 : i32
    %c0_i32_1 = arith.constant 0 : i32
    return %c0_i32, %c0_i32_0 : i32, i32
  }
  func.func @transform_6(%arg0: i32) -> (i32, i32) {
    %c0_i32 = arith.constant 0 : i32
    %c0_i32_0 = arith.constant 0 : i32
    %c0_i32_1 = arith.constant 0 : i32
    return %c0_i32, %c0_i32_0 : i32, i32
  }
  func.func @transform_7(%arg0: i32) -> (i32, i32) {
    %c0_i32 = arith.constant 0 : i32
    %c0_i32_0 = arith.constant 0 : i32
    return %arg0, %c0_i32 : i32, i32
  }
}

</mosaic_0001>

<llo_original>
// kernel: tpu_custom_call.1
$region0: #{tpu_custom_call.1}
  #allocation0 [shape = 'u32[]', space=smem, size = 0x4, offset = 0x4, fixed_abs, tag = 'smem constant byte address 0x4 - core index']
  #allocation1 [shape = 'u32[72,128]{1,0:T(1,128)}', space=vmem, size = 0x9000, scoped, tag = 'internal scratch']
  %s0 = inlined_call_operand.hbm [shape: f32[8,32], index: 0, kind: input, shape index: {}]
  %s1 = inlined_call_operand.hbm [shape: f32[32,128], index: 1, kind: input, shape index: {}]
  %s2 = inlined_call_operand.vmem [shape: f32[1,128], index: 2, kind: input, shape index: {}]
  %s3 = inlined_call_operand.hbm [shape: f32[128,128], index: 3, kind: input, shape index: {}]
  %s4 = inlined_call_operand.vmem [shape: f32[1,128], index: 4, kind: input, shape index: {}]
  %s5 = inlined_call_operand.hbm [shape: f32[128,128], index: 5, kind: input, shape index: {}]
  %s6 = inlined_call_operand.vmem [shape: f32[1,128], index: 6, kind: input, shape index: {}]
  %s7 = inlined_call_operand.hbm [shape: f32[8,128], index: 7, kind: output, shape index: {}]
  %s8 = sld [smem:[#allocation0]]
  $region54: #{tpu_custom_call.1} parent=0
    _
  %s10 = ssub.s32 1, %s8
  %s11 = scalar_select 0, %s10, %s8
  $region1: #{tpu_custom_call.1} parent=0
    #allocation2 [shape = 'u8[4096]{0}', space=vmem, size = 0x1000, scoped, tag = 'input window, operand 0, single buffered']
    #allocation3 [shape = 's32[1]{0}', space=sflag, size = 0x4, scoped, tag = 'scoped memory for tpu_custom_call.1']
    #allocation4 [shape = 's32[1]{0}', space=sflag, size = 0x4, scoped, tag = 'scoped memory for tpu_custom_call.1']
    #allocation5 [shape = 'u8[16384]{0}', space=vmem, size = 0x4000, scoped, tag = 'input window, operand 1, single buffered']
    #allocation6 [shape = 's32[1]{0}', space=sflag, size = 0x4, scoped, tag = 'scoped memory for tpu_custom_call.1']
    #allocation7 [shape = 'u8[65536]{0}', space=vmem, size = 0x10000, scoped, tag = 'input window, operand 3, single buffered']
    #allocation8 [shape = 'u8[65536]{0}', space=vmem, size = 0x10000, scoped, tag = 'input window, operand 5, single buffered']
    #allocation9 [shape = 's32[1]{0}', space=sflag, size = 0x4, scoped, tag = 'scoped memory for tpu_custom_call.1']
    #allocation10 [shape = 'u8[4096]{0}', space=vmem, size = 0x1000, scoped, tag = 'output window, operand 0, single buffered']
    %12 = vsyncpa [#allocation3], 0
    %13 = vsyncpa [#allocation6], 0
    %14 = vsyncpa [#allocation9], 0
    %15 = vsyncpa [#allocation4], 0
    // Predicated region
    $region2: #{tpu_custom_call.1} parent=1 // pred_check
      _
    $region3: #{tpu_custom_call.1} parent=1 // pred_check_branch
      %17 = sbr.rel (0) target = $region5
    $region4: #{tpu_custom_call.1} parent=1 // pred_region
      %19 = vsyncadd [#allocation3], 0
      %s21 = sshll.u32 %s0, 4
      %s22 = int_to_ptr.hbm [resolvable:$true] %s21
      %s23 = sshll.u32 [#allocation2], 4
      %s24 = int_to_ptr.vmem [resolvable:$true] %s23
      %26 = dma.hbm_to_vmem [thread:$0]  %s22, 128, %s24, [#allocation3]
    $region5: #{tpu_custom_call.1} parent=1 // pred_fallthru
      _
    // Predicated region
    $region6: #{tpu_custom_call.1} parent=1 // pred_check
      _
    $region7: #{tpu_custom_call.1} parent=1 // pred_check_branch
      %28 = sbr.rel (0) target = $region9
    $region8: #{tpu_custom_call.1} parent=1 // pred_region
      %30 = vsyncadd [#allocation6], 0
      %s31 = sshll.u32 %s1, 4
      %s32 = int_to_ptr.hbm [resolvable:$true] %s31
      %s33 = sshll.u32 [#allocation5], 4
      %s34 = int_to_ptr.vmem [resolvable:$true] %s33
      %39 = dma.hbm_to_vmem [thread:$0]  %s32, 512, %s34, [#allocation6], 128, 128, 8
    $region9: #{tpu_custom_call.1} parent=1 // pred_fallthru
      _
    // Predicated region
    $region10: #{tpu_custom_call.1} parent=1 // pred_check
      _
    $region11: #{tpu_custom_call.1} parent=1 // pred_check_branch
      %41 = sbr.rel (0) target = $region13
    $region12: #{tpu_custom_call.1} parent=1 // pred_region
      _
    $region13: #{tpu_custom_call.1} parent=1 // pred_fallthru
      _
    // Predicated region
    $region14: #{tpu_custom_call.1} parent=1 // pred_check
      _
    $region15: #{tpu_custom_call.1} parent=1 // pred_check_branch
      %43 = sbr.rel (0) target = $region17
    $region16: #{tpu_custom_call.1} parent=1 // pred_region
      %45 = vsyncadd [#allocation6], 0
      %s46 = sshll.u32 %s3, 4
      %s47 = int_to_ptr.hbm [resolvable:$true] %s46
      %s48 = sshll.u32 [#allocation7], 4
      %s49 = int_to_ptr.vmem [resolvable:$true] %s48
      %54 = dma.hbm_to_vmem [thread:$0]  %s47, 2048, %s49, [#allocation6], 128, 128, 8
    $region17: #{tpu_custom_call.1} parent=1 // pred_fallthru
      _
    // Predicated region
    $region18: #{tpu_custom_call.1} parent=1 // pred_check
      _
    $region19: #{tpu_custom_call.1} parent=1 // pred_check_branch
      %56 = sbr.rel (0) target = $region21
    $region20: #{tpu_custom_call.1} parent=1 // pred_region
      _
    $region21: #{tpu_custom_call.1} parent=1 // pred_fallthru
      _
    // Predicated region
    $region22: #{tpu_custom_call.1} parent=1 // pred_check
      _
    $region23: #{tpu_custom_call.1} parent=1 // pred_check_branch
      %58 = sbr.rel (0) target = $region25
    $region24: #{tpu_custom_call.1} parent=1 // pred_region
      %60 = vsyncadd [#allocation9], 0
      %s61 = sshll.u32 %s5, 4
      %s62 = int_to_ptr.hbm [resolvable:$true] %s61
      %s63 = sshll.u32 [#allocation8], 4
      %s64 = int_to_ptr.vmem [resolvable:$true] %s63
      %69 = dma.hbm_to_vmem [thread:$0]  %s62, 2048, %s64, [#allocation9], 128, 128, 8
    $region25: #{tpu_custom_call.1} parent=1 // pred_fallthru
      _
    // Predicated region
    $region26: #{tpu_custom_call.1} parent=1 // pred_check
      _
    $region27: #{tpu_custom_call.1} parent=1 // pred_check_branch
      %71 = sbr.rel (0) target = $region29
    $region28: #{tpu_custom_call.1} parent=1 // pred_region
      _
    $region29: #{tpu_custom_call.1} parent=1 // pred_fallthru
      _
    // Predicated region
    $region30: #{tpu_custom_call.1} parent=1 // pred_check
      _
    $region31: #{tpu_custom_call.1} parent=1 // pred_check_branch
      %73 = sbr.rel (0) target = $region33
    $region32: #{tpu_custom_call.1} parent=1 // pred_region
      %75 = dma.done [#allocation3], 128
    $region33: #{tpu_custom_call.1} parent=1 // pred_fallthru
      _
    // Predicated region
    $region34: #{tpu_custom_call.1} parent=1 // pred_check
      _
    $region35: #{tpu_custom_call.1} parent=1 // pred_check_branch
      %77 = sbr.rel (0) target = $region37
    $region36: #{tpu_custom_call.1} parent=1 // pred_region
      %79 = dma.done [#allocation6], 512
    $region37: #{tpu_custom_call.1} parent=1 // pred_fallthru
      _
    // Predicated region
    $region38: #{tpu_custom_call.1} parent=1 // pred_check
      _
    $region39: #{tpu_custom_call.1} parent=1 // pred_check_branch
      %81 = sbr.rel (0) target = $region41
    $region40: #{tpu_custom_call.1} parent=1 // pred_region
      %83 = dma.done [#allocation6], 2048
    $region41: #{tpu_custom_call.1} parent=1 // pred_fallthru
      _
    // Predicated region
    $region42: #{tpu_custom_call.1} parent=1 // pred_check
      _
    $region43: #{tpu_custom_call.1} parent=1 // pred_check_branch
      %85 = sbr.rel (0) target = $region45
    $region44: #{tpu_custom_call.1} parent=1 // pred_region
      %87 = dma.done [#allocation9], 2048
    $region45: #{tpu_custom_call.1} parent=1 // pred_fallthru
      _
    %v88 = vld [vmem:[#allocation2] sm:$0xff]
    %v89 = vld [vmem:[#allocation5] sm:$0xff]
    %v90 = vld [vmem:[#allocation5 + $0x8] sm:$0xff]
    %v91 = vld [vmem:[#allocation5 + $0x10] sm:$0xff]
    %v92 = vld [vmem:[#allocation5 + $0x18] sm:$0xff]
    %v93 = vld [vmem:[%s2] sm:$0x1]
    %v95 = vperm.slane %v93, 0
    %vm97 = vcmask 261120
    %v99 = vsel %vm97, %v88, 0
    %101 = vmatpush.msra.mxu0 0.0
    %102 = vmatpush.msra.mxu0 0.0
    %103 = vmatpush.msra.mxu0 0.0
    %104 = vmatpush.msra.mxu0 0.0
    %105 = vmatpush.msra.mxu0 0.0
    %106 = vmatpush.msra.mxu0 0.0
    %107 = vmatpush.msra.mxu0 0.0
    %108 = vmatpush.msra.mxu0 0.0
    %109 = vmatpush.msra.mxu0 0.0
    %110 = vmatpush.msra.mxu0 0.0
    %111 = vmatpush.msra.mxu0 0.0
    %112 = vmatpush.msra.mxu0 0.0
    %113 = vmatpush.msra.mxu0 %v92
    %114 = vmatpush.msra.mxu0 %v91
    %115 = vmatpush.msra.mxu0 %v90
    %116 = vmatpush.msra.mxu0 %v89
    %117 = vmatmul.f32.gmra.mxu0 %v99
    %v118 = vpop.f32.mrf.mxu0
    %v119 = vadd.f32 %v95, %v118
    %120 = vdwg.mxu0
    %v121 = vxor.u32 %v119, 2147483648
    %v122 = vmul.f32 %v121, 1.442695
    %v123 = vpow.pop %v122
    %v124 = vadd.f32 %v123, 1.0
    %v125 = vrcp.pop %v124
    %v126 = vmul.f32 %v124, %v125
    %v127 = vsub.f32 1.0, %v126
    %v128 = vmul.f32 %v125, %v127
    %v129 = vadd.f32 %v125, %v128
    %vm130 = vweird.f32 %v124
    %vm131 = vweird.f32 %v125
    %vm132 = vmor %vm130, %vm131
    %v133 = vsel %vm132, %v125, %v129
    %v134 = vand.u32 2147483647, %v124
    %vm135 = vcmp.eq.f32.partialorder %v134, 8.507059e+37
    %v136 = vand.u32 %v124, 2147483648
    %v137 = vor.u32 1.1754944e-38, %v136
    %v138 = vsel %vm135, %v137, %v133
    %v139 = vmul.f32 1.0, %v138
    %v140 = vld [vmem:[#allocation7] sm:$0xff]
    %v141 = vld [vmem:[#allocation7 + $0x8] sm:$0xff]
    %v142 = vld [vmem:[#allocation7 + $0x10] sm:$0xff]
    %v143 = vld [vmem:[#allocation7 + $0x18] sm:$0xff]
    %v144 = vld [vmem:[#allocation7 + $0x20] sm:$0xff]
    %v145 = vld [vmem:[#allocation7 + $0x28] sm:$0xff]
    %v146 = vld [vmem:[#allocation7 + $0x30] sm:$0xff]
    %v147 = vld [vmem:[#allocation7 + $0x38] sm:$0xff]
    %v148 = vld [vmem:[#allocation7 + $0x40] sm:$0xff]
    %v149 = vld [vmem:[#allocation7 + $0x48] sm:$0xff]
    %v150 = vld [vmem:[#allocation7 + $0x50] sm:$0xff]
    %v151 = vld [vmem:[#allocation7 + $0x58] sm:$0xff]
    %v152 = vld [vmem:[#allocation7 + $0x60] sm:$0xff]
    %v153 = vld [vmem:[#allocation7 + $0x68] sm:$0xff]
    %v154 = vld [vmem:[#allocation7 + $0x70] sm:$0xff]
    %v155 = vld [vmem:[#allocation7 + $0x78] sm:$0xff]
    %v156 = vld [vmem:[%s4] sm:$0x1]
    %v158 = vperm.slane %v156, 0
    %160 = vmatpush.msra.mxu0 %v155
    %161 = vmatpush.msra.mxu0 %v154
    %162 = vmatpush.msra.mxu0 %v153
    %163 = vmatpush.msra.mxu0 %v152
    %164 = vmatpush.msra.mxu0 %v151
    %165 = vmatpush.msra.mxu0 %v150
    %166 = vmatpush.msra.mxu0 %v149
    %167 = vmatpush.msra.mxu0 %v148
    %168 = vmatpush.msra.mxu0 %v147
    %169 = vmatpush.msra.mxu0 %v146
    %170 = vmatpush.msra.mxu0 %v145
    %171 = vmatpush.msra.mxu0 %v144
    %172 = vmatpush.msra.mxu0 %v143
    %173 = vmatpush.msra.mxu0 %v142
    %174 = vmatpush.msra.mxu0 %v141
    %175 = vmatpush.msra.mxu0 %v140
    %176 = vmatmul.f32.gmra.mxu0 %v139
    %v177 = vpop.f32.mrf.mxu0
    %v178 = vadd.f32 %v158, %v177
    %179 = vdwg.mxu0
    %v180 = vxor.u32 %v178, 2147483648
    %v181 = vmul.f32 %v180, 1.442695
    %v182 = vpow.pop %v181
    %v183 = vadd.f32 %v182, 1.0
    %v184 = vrcp.pop %v183
    %v185 = vmul.f32 %v183, %v184
    %v186 = vsub.f32 1.0, %v185
    %v187 = vmul.f32 %v184, %v186
    %v188 = vadd.f32 %v184, %v187
    %vm189 = vweird.f32 %v183
    %vm190 = vweird.f32 %v184
    %vm191 = vmor %vm189, %vm190
    %v192 = vsel %vm191, %v184, %v188
    %v193 = vand.u32 2147483647, %v183
    %vm194 = vcmp.eq.f32.partialorder %v193, 8.507059e+37
    %v195 = vand.u32 %v183, 2147483648
    %v196 = vor.u32 1.1754944e-38, %v195
    %v197 = vsel %vm194, %v196, %v192
    %v198 = vmul.f32 1.0, %v197
    %v199 = vld [vmem:[#allocation8] sm:$0xff]
    %v200 = vld [vmem:[#allocation8 + $0x8] sm:$0xff]
    %v201 = vld [vmem:[#allocation8 + $0x10] sm:$0xff]
    %v202 = vld [vmem:[#allocation8 + $0x18] sm:$0xff]
    %v203 = vld [vmem:[#allocation8 + $0x20] sm:$0xff]
    %v204 = vld [vmem:[#allocation8 + $0x28] sm:$0xff]
    %v205 = vld [vmem:[#allocation8 + $0x30] sm:$0xff]
    %v206 = vld [vmem:[#allocation8 + $0x38] sm:$0xff]
    %v207 = vld [vmem:[#allocation8 + $0x40] sm:$0xff]
    %v208 = vld [vmem:[#allocation8 + $0x48] sm:$0xff]
    %v209 = vld [vmem:[#allocation8 + $0x50] sm:$0xff]
    %v210 = vld [vmem:[#allocation8 + $0x58] sm:$0xff]
    %v211 = vld [vmem:[#allocation8 + $0x60] sm:$0xff]
    %v212 = vld [vmem:[#allocation8 + $0x68] sm:$0xff]
    %v213 = vld [vmem:[#allocation8 + $0x70] sm:$0xff]
    %v214 = vld [vmem:[#allocation8 + $0x78] sm:$0xff]
    %v215 = vld [vmem:[%s6] sm:$0x1]
    %v217 = vperm.slane %v215, 0
    %219 = vmatpush.msra.mxu0 %v214
    %220 = vmatpush.msra.mxu0 %v213
    %221 = vmatpush.msra.mxu0 %v212
    %222 = vmatpush.msra.mxu0 %v211
    %223 = vmatpush.msra.mxu0 %v210
    %224 = vmatpush.msra.mxu0 %v209
    %225 = vmatpush.msra.mxu0 %v208
    %226 = vmatpush.msra.mxu0 %v207
    %227 = vmatpush.msra.mxu0 %v206
    %228 = vmatpush.msra.mxu0 %v205
    %229 = vmatpush.msra.mxu0 %v204
    %230 = vmatpush.msra.mxu0 %v203
    %231 = vmatpush.msra.mxu0 %v202
    %232 = vmatpush.msra.mxu0 %v201
    %233 = vmatpush.msra.mxu0 %v200
    %234 = vmatpush.msra.mxu0 %v199
    %235 = vmatmul.f32.gmra.mxu0 %v198
    %v236 = vpop.f32.mrf.mxu0
    %v237 = vadd.f32 %v217, %v236
    %238 = vdwg.mxu0
    %239 = vst [vmem:[#allocation10] sm:$0xff] %v237
    // Predicated region
    $region46: #{tpu_custom_call.1} parent=1 // pred_check
      _
    $region47: #{tpu_custom_call.1} parent=1 // pred_check_branch
      %241 = sbr.rel (0) target = $region49
    $region48: #{tpu_custom_call.1} parent=1 // pred_region
      %243 = vsyncadd [#allocation4], 0
      %s245 = sshll.u32 [#allocation10], 4
      %s246 = int_to_ptr.vmem [resolvable:$true] %s245
      %s247 = sshll.u32 %s7, 4
      %s248 = int_to_ptr.hbm [resolvable:$true] %s247
      %250 = dma.vmem_to_hbm [thread:$0]  %s246, 128, %s248, [#allocation4]
    $region49: #{tpu_custom_call.1} parent=1 // pred_fallthru
      _
    // Predicated region
    $region50: #{tpu_custom_call.1} parent=1 // pred_check
      _
    $region51: #{tpu_custom_call.1} parent=1 // pred_check_branch
      %252 = sbr.rel (0) target = $region53
    $region52: #{tpu_custom_call.1} parent=1 // pred_region
      %254 = dma.done [#allocation4], 128
    $region53: #{tpu_custom_call.1} parent=1 // pred_fallthru
      _
    %255 = vsyncpa [#allocation3], 1
    %256 = vsyncpa [#allocation6], 1
    %257 = vsyncpa [#allocation9], 1
    %258 = vsyncpa [#allocation4], 1

// kernel: tpu_custom_call.1
$region0: #{tpu_custom_call.1}
  #allocation0 [shape = 'u32[]', space=smem, size = 0x4, offset = 0x4, fixed_abs, tag = 'smem constant byte address 0x4 - core index']
  #allocation1 [shape = 'u32[72,128]{1,0:T(1,128)}', space=vmem, size = 0x9000, scoped, tag = 'internal scratch']
  %s0 = inlined_call_operand.hbm [shape: f32[8,32], index: 0, kind: input, shape index: {}]
  %s1 = inlined_call_operand.hbm [shape: f32[32,128], index: 1, kind: input, shape index: {}]
  %s2 = inlined_call_operand.vmem [shape: f32[1,128], index: 2, kind: input, shape index: {}]
  %s3 = inlined_call_operand.hbm [shape: f32[128,128], index: 3, kind: input, shape index: {}]
  %s4 = inlined_call_operand.vmem [shape: f32[1,128], index: 4, kind: input, shape index: {}]
  %s5 = inlined_call_operand.hbm [shape: f32[128,128], index: 5, kind: input, shape index: {}]
  %s6 = inlined_call_operand.vmem [shape: f32[1,128], index: 6, kind: input, shape index: {}]
  %s7 = inlined_call_operand.hbm [shape: f32[8,128], index: 7, kind: output, shape index: {}]
  %s8 = sld [smem:[#allocation0]]
  $region54: #{tpu_custom_call.1} parent=0
    _
  %s10 = ssub.s32 1, %s8
  %s11 = scalar_select 0, %s10, %s8
  $region1: #{tpu_custom_call.1} parent=0
    #allocation2 [shape = 'u8[4096]{0}', space=vmem, size = 0x1000, scoped, tag = 'input window, operand 0, single buffered']
    #allocation3 [shape = 's32[1]{0}', space=sflag, size = 0x4, scoped, tag = 'scoped memory for tpu_custom_call.1']
    #allocation4 [shape = 's32[1]{0}', space=sflag, size = 0x4, scoped, tag = 'scoped memory for tpu_custom_call.1']
    #allocation5 [shape = 'u8[16384]{0}', space=vmem, size = 0x4000, scoped, tag = 'input window, operand 1, single buffered']
    #allocation6 [shape = 's32[1]{0}', space=sflag, size = 0x4, scoped, tag = 'scoped memory for tpu_custom_call.1']
    #allocation7 [shape = 'u8[65536]{0}', space=vmem, size = 0x10000, scoped, tag = 'input window, operand 3, single buffered']
    #allocation8 [shape = 'u8[65536]{0}', space=vmem, size = 0x10000, scoped, tag = 'input window, operand 5, single buffered']
    #allocation9 [shape = 's32[1]{0}', space=sflag, size = 0x4, scoped, tag = 'scoped memory for tpu_custom_call.1']
    #allocation10 [shape = 'u8[4096]{0}', space=vmem, size = 0x1000, scoped, tag = 'output window, operand 0, single buffered']
    %12 = vsyncpa [#allocation3], 0
    %13 = vsyncpa [#allocation6], 0
    %14 = vsyncpa [#allocation9], 0
    %15 = vsyncpa [#allocation4], 0
    // Predicated region
    $region2: #{tpu_custom_call.1} parent=1 // pred_check
      _
    $region3: #{tpu_custom_call.1} parent=1 // pred_check_branch
      %17 = sbr.rel (0) target = $region5
    $region4: #{tpu_custom_call.1} parent=1 // pred_region
      %19 = vsyncadd [#allocation3], 0
      %s21 = sshll.u32 %s0, 4
      %s22 = int_to_ptr.hbm [resolvable:$true] %s21
      %s23 = sshll.u32 [#allocation2], 4
      %s24 = int_to_ptr.vmem [resolvable:$true] %s23
      %26 = dma.hbm_to_vmem [thread:$0]  %s22, 128, %s24, [#allocation3]
    $region5: #{tpu_custom_call.1} parent=1 // pred_fallthru
      _
    // Predicated region
    $region6: #{tpu_custom_call.1} parent=1 // pred_check
      _
    $region7: #{tpu_custom_call.1} parent=1 // pred_check_branch
      %28 = sbr.rel (0) target = $region9
    $region8: #{tpu_custom_call.1} parent=1 // pred_region
      %30 = vsyncadd [#allocation6], 0
      %s31 = sshll.u32 %s1, 4
      %s32 = int_to_ptr.hbm [resolvable:$true] %s31
      %s33 = sshll.u32 [#allocation5], 4
      %s34 = int_to_ptr.vmem [resolvable:$true] %s33
      %39 = dma.hbm_to_vmem [thread:$0]  %s32, 512, %s34, [#allocation6], 128, 128, 8
    $region9: #{tpu_custom_call.1} parent=1 // pred_fallthru
      _
    // Predicated region
    $region10: #{tpu_custom_call.1} parent=1 // pred_check
      _
    $region11: #{tpu_custom_call.1} parent=1 // pred_check_branch
      %41 = sbr.rel (0) target = $region13
    $region12: #{tpu_custom_call.1} parent=1 // pred_region
      _
    $region13: #{tpu_custom_call.1} parent=1 // pred_fallthru
      _
    // Predicated region
    $region14: #{tpu_custom_call.1} parent=1 // pred_check
      _
    $region15: #{tpu_custom_call.1} parent=1 // pred_check_branch
      %43 = sbr.rel (0) target = $region17
    $region16: #{tpu_custom_call.1} parent=1 // pred_region
      %45 = vsyncadd [#allocation6], 0
      %s46 = sshll.u32 %s3, 4
      %s47 = int_to_ptr.hbm [resolvable:$true] %s46
      %s48 = sshll.u32 [#allocation7], 4
      %s49 = int_to_ptr.vmem [resolvable:$true] %s48
      %54 = dma.hbm_to_vmem [thread:$0]  %s47, 2048, %s49, [#allocation6], 128, 128, 8
    $region17: #{tpu_custom_call.1} parent=1 // pred_fallthru
      _
    // Predicated region
    $region18: #{tpu_custom_call.1} parent=1 // pred_check
      _
    $region19: #{tpu_custom_call.1} parent=1 // pred_check_branch
      %56 = sbr.rel (0) target = $region21
    $region20: #{tpu_custom_call.1} parent=1 // pred_region
      _
    $region21: #{tpu_custom_call.1} parent=1 // pred_fallthru
      _
    // Predicated region
    $region22: #{tpu_custom_call.1} parent=1 // pred_check
      _
    $region23: #{tpu_custom_call.1} parent=1 // pred_check_branch
      %58 = sbr.rel (0) target = $region25
    $region24: #{tpu_custom_call.1} parent=1 // pred_region
      %60 = vsyncadd [#allocation9], 0
      %s61 = sshll.u32 %s5, 4
      %s62 = int_to_ptr.hbm [resolvable:$true] %s61
      %s63 = sshll.u32 [#allocation8], 4
      %s64 = int_to_ptr.vmem [resolvable:$true] %s63
      %69 = dma.hbm_to_vmem [thread:$0]  %s62, 2048, %s64, [#allocation9], 128, 128, 8
    $region25: #{tpu_custom_call.1} parent=1 // pred_fallthru
      _
    // Predicated region
    $region26: #{tpu_custom_call.1} parent=1 // pred_check
      _
    $region27: #{tpu_custom_call.1} parent=1 // pred_check_branch
      %71 = sbr.rel (0) target = $region29
    $region28: #{tpu_custom_call.1} parent=1 // pred_region
      _
    $region29: #{tpu_custom_call.1} parent=1 // pred_fallthru
      _
    // Predicated region
    $region30: #{tpu_custom_call.1} parent=1 // pred_check
      _
    $region31: #{tpu_custom_call.1} parent=1 // pred_check_branch
      %73 = sbr.rel (0) target = $region33
    $region32: #{tpu_custom_call.1} parent=1 // pred_region
      %75 = dma.done [#allocation3], 128
    $region33: #{tpu_custom_call.1} parent=1 // pred_fallthru
      _
    // Predicated region
    $region34: #{tpu_custom_call.1} parent=1 // pred_check
      _
    $region35: #{tpu_custom_call.1} parent=1 // pred_check_branch
      %77 = sbr.rel (0) target = $region37
    $region36: #{tpu_custom_call.1} parent=1 // pred_region
      %79 = dma.done [#allocation6], 512
    $region37: #{tpu_custom_call.1} parent=1 // pred_fallthru
      _
    // Predicated region
    $region38: #{tpu_custom_call.1} parent=1 // pred_check
      _
    $region39: #{tpu_custom_call.1} parent=1 // pred_check_branch
      %81 = sbr.rel (0) target = $region41
    $region40: #{tpu_custom_call.1} parent=1 // pred_region
      %83 = dma.done [#allocation6], 2048
    $region41: #{tpu_custom_call.1} parent=1 // pred_fallthru
      _
    // Predicated region
    $region42: #{tpu_custom_call.1} parent=1 // pred_check
      _
    $region43: #{tpu_custom_call.1} parent=1 // pred_check_branch
      %85 = sbr.rel (0) target = $region45
    $region44: #{tpu_custom_call.1} parent=1 // pred_region
      %87 = dma.done [#allocation9], 2048
    $region45: #{tpu_custom_call.1} parent=1 // pred_fallthru
      _
    %v88 = vld [vmem:[#allocation2] sm:$0xff]
    %v89 = vld [vmem:[#allocation5] sm:$0xff]
    %v90 = vld [vmem:[#allocation5 + $0x8] sm:$0xff]
    %v91 = vld [vmem:[#allocation5 + $0x10] sm:$0xff]
    %v92 = vld [vmem:[#allocation5 + $0x18] sm:$0xff]
    %v93 = vld [vmem:[%s2] sm:$0x1]
    %v95 = vperm.slane %v93, 0
    %vm97 = vcmask 261120
    %v99 = vsel %vm97, %v88, 0
    %101 = vmatpush.msra.mxu0 0.0
    %102 = vmatpush.msra.mxu0 0.0
    %103 = vmatpush.msra.mxu0 0.0
    %104 = vmatpush.msra.mxu0 0.0
    %105 = vmatpush.msra.mxu0 0.0
    %106 = vmatpush.msra.mxu0 0.0
    %107 = vmatpush.msra.mxu0 0.0
    %108 = vmatpush.msra.mxu0 0.0
    %109 = vmatpush.msra.mxu0 0.0
    %110 = vmatpush.msra.mxu0 0.0
    %111 = vmatpush.msra.mxu0 0.0
    %112 = vmatpush.msra.mxu0 0.0
    %113 = vmatpush.msra.mxu0 %v92
    %114 = vmatpush.msra.mxu0 %v91
    %115 = vmatpush.msra.mxu0 %v90
    %116 = vmatpush.msra.mxu0 %v89
    %117 = vmatmul.f32.gmra.mxu0 %v99
    %v118 = vpop.f32.mrf.mxu0
    %v119 = vadd.f32 %v95, %v118
    %120 = vdwg.mxu0
    %v121 = vxor.u32 %v119, 2147483648
    %v122 = vmul.f32 %v121, 1.442695
    %v123 = vpow.pop %v122
    %v124 = vadd.f32 %v123, 1.0
    %v125 = vrcp.pop %v124
    %v126 = vmul.f32 %v124, %v125
    %v127 = vsub.f32 1.0, %v126
    %v128 = vmul.f32 %v125, %v127
    %v129 = vadd.f32 %v125, %v128
    %vm130 = vweird.f32 %v124
    %vm131 = vweird.f32 %v125
    %vm132 = vmor %vm130, %vm131
    %v133 = vsel %vm132, %v125, %v129
    %v134 = vand.u32 2147483647, %v124
    %vm135 = vcmp.eq.f32.partialorder %v134, 8.507059e+37
    %v136 = vand.u32 %v124, 2147483648
    %v137 = vor.u32 1.1754944e-38, %v136
    %v138 = vsel %vm135, %v137, %v133
    %v139 = vmul.f32 1.0, %v138
    %v140 = vld [vmem:[#allocation7] sm:$0xff]
    %v141 = vld [vmem:[#allocation7 + $0x8] sm:$0xff]
    %v142 = vld [vmem:[#allocation7 + $0x10] sm:$0xff]
    %v143 = vld [vmem:[#allocation7 + $0x18] sm:$0xff]
    %v144 = vld [vmem:[#allocation7 + $0x20] sm:$0xff]
    %v145 = vld [vmem:[#allocation7 + $0x28] sm:$0xff]
    %v146 = vld [vmem:[#allocation7 + $0x30] sm:$0xff]
    %v147 = vld [vmem:[#allocation7 + $0x38] sm:$0xff]
    %v148 = vld [vmem:[#allocation7 + $0x40] sm:$0xff]
    %v149 = vld [vmem:[#allocation7 + $0x48] sm:$0xff]
    %v150 = vld [vmem:[#allocation7 + $0x50] sm:$0xff]
    %v151 = vld [vmem:[#allocation7 + $0x58] sm:$0xff]
    %v152 = vld [vmem:[#allocation7 + $0x60] sm:$0xff]
    %v153 = vld [vmem:[#allocation7 + $0x68] sm:$0xff]
    %v154 = vld [vmem:[#allocation7 + $0x70] sm:$0xff]
    %v155 = vld [vmem:[#allocation7 + $0x78] sm:$0xff]
    %v156 = vld [vmem:[%s4] sm:$0x1]
    %v158 = vperm.slane %v156, 0
    %160 = vmatpush.msra.mxu0 %v155
    %161 = vmatpush.msra.mxu0 %v154
    %162 = vmatpush.msra.mxu0 %v153
    %163 = vmatpush.msra.mxu0 %v152
    %164 = vmatpush.msra.mxu0 %v151
    %165 = vmatpush.msra.mxu0 %v150
    %166 = vmatpush.msra.mxu0 %v149
    %167 = vmatpush.msra.mxu0 %v148
    %168 = vmatpush.msra.mxu0 %v147
    %169 = vmatpush.msra.mxu0 %v146
    %170 = vmatpush.msra.mxu0 %v145
    %171 = vmatpush.msra.mxu0 %v144
    %172 = vmatpush.msra.mxu0 %v143
    %173 = vmatpush.msra.mxu0 %v142
    %174 = vmatpush.msra.mxu0 %v141
    %175 = vmatpush.msra.mxu0 %v140
    %176 = vmatmul.f32.gmra.mxu0 %v139
    %v177 = vpop.f32.mrf.mxu0
    %v178 = vadd.f32 %v158, %v177
    %179 = vdwg.mxu0
    %v180 = vxor.u32 %v178, 2147483648
    %v181 = vmul.f32 %v180, 1.442695
    %v182 = vpow.pop %v181
    %v183 = vadd.f32 %v182, 1.0
    %v184 = vrcp.pop %v183
    %v185 = vmul.f32 %v183, %v184
    %v186 = vsub.f32 1.0, %v185
    %v187 = vmul.f32 %v184, %v186
    %v188 = vadd.f32 %v184, %v187
    %vm189 = vweird.f32 %v183
    %vm190 = vweird.f32 %v184
    %vm191 = vmor %vm189, %vm190
    %v192 = vsel %vm191, %v184, %v188
    %v193 = vand.u32 2147483647, %v183
    %vm194 = vcmp.eq.f32.partialorder %v193, 8.507059e+37
    %v195 = vand.u32 %v183, 2147483648
    %v196 = vor.u32 1.1754944e-38, %v195
    %v197 = vsel %vm194, %v196, %v192
    %v198 = vmul.f32 1.0, %v197
    %v199 = vld [vmem:[#allocation8] sm:$0xff]
    %v200 = vld [vmem:[#allocation8 + $0x8] sm:$0xff]
    %v201 = vld [vmem:[#allocation8 + $0x10] sm:$0xff]
    %v202 = vld [vmem:[#allocation8 + $0x18] sm:$0xff]
    %v203 = vld [vmem:[#allocation8 + $0x20] sm:$0xff]
    %v204 = vld [vmem:[#allocation8 + $0x28] sm:$0xff]
    %v205 = vld [vmem:[#allocation8 + $0x30] sm:$0xff]
    %v206 = vld [vmem:[#allocation8 + $0x38] sm:$0xff]
    %v207 = vld [vmem:[#allocation8 + $0x40] sm:$0xff]
    %v208 = vld [vmem:[#allocation8 + $0x48] sm:$0xff]
    %v209 = vld [vmem:[#allocation8 + $0x50] sm:$0xff]
    %v210 = vld [vmem:[#allocation8 + $0x58] sm:$0xff]
    %v211 = vld [vmem:[#allocation8 + $0x60] sm:$0xff]
    %v212 = vld [vmem:[#allocation8 + $0x68] sm:$0xff]
    %v213 = vld [vmem:[#allocation8 + $0x70] sm:$0xff]
    %v214 = vld [vmem:[#allocation8 + $0x78] sm:$0xff]
    %v215 = vld [vmem:[%s6] sm:$0x1]
    %v217 = vperm.slane %v215, 0
    %219 = vmatpush.msra.mxu0 %v214
    %220 = vmatpush.msra.mxu0 %v213
    %221 = vmatpush.msra.mxu0 %v212
    %222 = vmatpush.msra.mxu0 %v211
    %223 = vmatpush.msra.mxu0 %v210
    %224 = vmatpush.msra.mxu0 %v209
    %225 = vmatpush.msra.mxu0 %v208
    %226 = vmatpush.msra.mxu0 %v207
    %227 = vmatpush.msra.mxu0 %v206
    %228 = vmatpush.msra.mxu0 %v205
    %229 = vmatpush.msra.mxu0 %v204
    %230 = vmatpush.msra.mxu0 %v203
    %231 = vmatpush.msra.mxu0 %v202
    %232 = vmatpush.msra.mxu0 %v201
    %233 = vmatpush.msra.mxu0 %v200
    %234 = vmatpush.msra.mxu0 %v199
    %235 = vmatmul.f32.gmra.mxu0 %v198
    %v236 = vpop.f32.mrf.mxu0
    %v237 = vadd.f32 %v217, %v236
    %238 = vdwg.mxu0
    %239 = vst [vmem:[#allocation10] sm:$0xff] %v237
    // Predicated region
    $region46: #{tpu_custom_call.1} parent=1 // pred_check
      _
    $region47: #{tpu_custom_call.1} parent=1 // pred_check_branch
      %241 = sbr.rel (0) target = $region49
    $region48: #{tpu_custom_call.1} parent=1 // pred_region
      %243 = vsyncadd [#allocation4], 0
      %s245 = sshll.u32 [#allocation10], 4
      %s246 = int_to_ptr.vmem [resolvable:$true] %s245
      %s247 = sshll.u32 %s7, 4
      %s248 = int_to_ptr.hbm [resolvable:$true] %s247
      %250 = dma.vmem_to_hbm [thread:$0]  %s246, 128, %s248, [#allocation4]
    $region49: #{tpu_custom_call.1} parent=1 // pred_fallthru
      _
    // Predicated region
    $region50: #{tpu_custom_call.1} parent=1 // pred_check
      _
    $region51: #{tpu_custom_call.1} parent=1 // pred_check_branch
      %252 = sbr.rel (0) target = $region53
    $region52: #{tpu_custom_call.1} parent=1 // pred_region
      %254 = dma.done [#allocation4], 128
    $region53: #{tpu_custom_call.1} parent=1 // pred_fallthru
      _
    %255 = vsyncpa [#allocation3], 1
    %256 = vsyncpa [#allocation6], 1
    %257 = vsyncpa [#allocation9], 1
    %258 = vsyncpa [#allocation4], 1

</llo_original>
